<compile_context>
chip_gen: v7x
topology: tpu7x:2x2x1
jax: 0.10.0
libtpu: 0.0.40
codegen_flags: <defaults>
</compile_context>

<pallas_src>
import jax
import jax.numpy as jnp
from jax.experimental import pallas as pl
from jax.experimental.pallas import tpu as pltpu

_SUBLANE = 8
_LANE = 128


def _weighted_sum_kernel(w_ref, *refs):
    """refs = (a_0, ..., a_{K-1}, out).

    w_ref is the (K,) scalar-prefetch weight vector in SMEM.  K is tiny, so
    the weighted sum over K is a statically unrolled loop and each output
    tile is written once per grid step (single streaming pass over HBM).
    """
    out_ref = refs[-1]
    a_refs = refs[:-1]
    acc = w_ref[0] * a_refs[0][...].astype(jnp.float32)
    for k in range(1, len(a_refs)):
        acc = acc + w_ref[k] * a_refs[k][...].astype(jnp.float32)
    out_ref[...] = acc.astype(out_ref.dtype)


def _pick_row_tile(M, N, K, itemsize, vmem_budget_bytes):
    """Largest row tile whose working set (K double-buffered input tiles +
    double-buffered output tile) fits the VMEM budget."""
    bytes_per_row = N * itemsize * (2 * K + 2)
    tm = max(vmem_budget_bytes // bytes_per_row, _SUBLANE)
    tm = min(tm, 2048)  # >~512 rows is already at the HBM roofline
    if tm >= M:
        return M  # single tile covers all rows (skip the grid entirely)
    return max((tm // _SUBLANE) * _SUBLANE, _SUBLANE)  # keep (8,128)-aligned


def _weighted_sum_2d(weights, mats, vmem_budget_bytes):
    K = len(mats)
    M, N = mats[0].shape
    dtype = mats[0].dtype
    itemsize = jnp.dtype(dtype).itemsize

    tm = _pick_row_tile(M, N, K, itemsize, vmem_budget_bytes)
    grid = (pl.cdiv(M, tm),)

    in_specs = [pl.BlockSpec((tm, N), lambda i, w: (i, 0)) for _ in range(K)]
    out_spec = pl.BlockSpec((tm, N), lambda i, w: (i, 0))

    grid_spec = pltpu.PrefetchScalarGridSpec(
        num_scalar_prefetch=1,
        grid=grid,
        in_specs=in_specs,
        out_specs=out_spec,
    )

    return pl.pallas_call(
        _weighted_sum_kernel,
        out_shape=jax.ShapeDtypeStruct((M, N), dtype),
        grid_spec=grid_spec,
        compiler_params=pltpu.CompilerParams(
            dimension_semantics=("parallel",),
            vmem_limit_bytes=32 * 1024 * 1024,
        ),
    )(weights, *mats)


def weighted_sum(weights, adjacency_matrices, *, vmem_budget_bytes=12 * 1024 * 1024):
    """Pallas equivalent of WeightedSumLayer.forward.

    adjacency_matrices: list of K same-shape float arrays (data.As).  Supports
      dense (M, N) adjacency matrices and 1-D (E,) per-edge weight vectors
      (the form GCNConv's edge_weight expects).
    weights: (K,) float32 parameter vector.
    """
    if not isinstance(adjacency_matrices, list):
        raise TypeError("adjacency_matrices must be a list of tensors.")
    K = len(adjacency_matrices)
    assert K >= 1 and weights.shape == (K,)
    weights = weights.astype(jnp.float32)

    first = adjacency_matrices[0]
    if first.ndim == 2:
        return _weighted_sum_2d(weights, adjacency_matrices, vmem_budget_bytes)

    if first.ndim == 1:
        # Per-edge weight vectors: pad to a (8,128) multiple and view as a
        # lane-dense 2-D slab so the same streaming kernel applies.
        E = first.shape[0]
        pad = (-E) % (_SUBLANE * _LANE)
        e_pad = E + pad
        mats2d = [
            jnp.pad(a, (0, pad)).reshape(e_pad // _LANE, _LANE)
            for a in adjacency_matrices
        ]
        out2d = _weighted_sum_2d(weights, mats2d, vmem_budget_bytes)
        return out2d.reshape(e_pad)[:E]

    raise ValueError("adjacency_matrices must be 1-D or 2-D arrays.")


def check_for_nans(x, name):
    """JAX equivalent of the module's NaN guard (host-side)."""
    has_nan = bool(jnp.isnan(x).any())
    if has_nan:
        print(f"NaN detected in {name}")
    return has_nan


if __name__ == "__main__":
    key = jax.random.PRNGKey(0)

    # --- case 1: module defaults (num_matrices=2), small dense adjacency ---
    num_matrices = 2
    M = N = 128
    k_w, k_a = jax.random.split(key)
    weights = jax.random.normal(k_w, (num_matrices,), dtype=jnp.float32)  # torch.randn
    adj_keys = jax.random.split(k_a, num_matrices)
    adjacency_matrices = [
        jax.random.normal(kk, (M, N), dtype=jnp.float32) for kk in adj_keys
    ]

    out = jax.block_until_ready(weighted_sum(weights, adjacency_matrices))
    ref = sum(w * A for w, A in zip(weights, adjacency_matrices))
    assert out.shape == (M, N) and out.dtype == jnp.float32
    assert not check_for_nans(out, "edge_weight_meta")
    assert jnp.allclose(out, ref, atol=1e-5, rtol=1e-5)

    # --- case 2: K=3, non-square / non-multiple-of-8 rows ---
    k_w2, k_a2 = jax.random.split(jax.random.PRNGKey(1))
    K2, M2, N2 = 3, 200, 256
    weights2 = jax.random.normal(k_w2, (K2,), dtype=jnp.float32)
    adj2 = [
        jax.random.normal(kk, (M2, N2), dtype=jnp.float32)
        for kk in jax.random.split(k_a2, K2)
    ]
    out2 = jax.block_until_ready(weighted_sum(weights2, adj2))
    ref2 = sum(w * A for w, A in zip(weights2, adj2))
    assert jnp.allclose(out2, ref2, atol=1e-5, rtol=1e-5)

    # --- case 3: K=2, 1-D per-edge weight vectors (GCNConv edge_weight form) ---
    k_w3, k_a3 = jax.random.split(jax.random.PRNGKey(2))
    K3, E3 = 2, 1000
    weights3 = jax.random.normal(k_w3, (K3,), dtype=jnp.float32)
    adj3 = [
        jax.random.normal(kk, (E3,), dtype=jnp.float32)
        for kk in jax.random.split(k_a3, K3)
    ]
    out3 = jax.block_until_ready(weighted_sum(weights3, adj3))
    ref3 = sum(w * A for w, A in zip(weights3, adj3))
    assert out3.shape == (E3,)
    assert jnp.allclose(out3, ref3, atol=1e-5, rtol=1e-5)

    print("KERNEL_OK")
</pallas_src>

<mosaic_0001>
module attributes {stable_mosaic.version = 11 : i64} {
  func.func @_weighted_sum_kernel(%arg0: i32, %arg1: memref<2xf32, #tpu.memory_space<smem>>, %arg2: memref<128x128xf32, #tpu.memory_space<vmem>>, %arg3: memref<128x128xf32, #tpu.memory_space<vmem>>, %arg4: memref<128x128xf32, #tpu.memory_space<vmem>>) attributes {dimension_semantics = [#tpu.dimension_semantics<parallel>], iteration_bounds = array<i64: 1>, scalar_prefetch = 1 : i64, scratch_operands = 0 : i64, tpu.core_type = #tpu.core_type<tc>, window_params = [{transform_indices = @transform_0, window_bounds = array<i64: 128, 128>}, {transform_indices = @transform_1, window_bounds = array<i64: 128, 128>}, {transform_indices = @transform_2, window_bounds = array<i64: 128, 128>}]} {
    %c0 = arith.constant 0 : index
    %0 = memref.load %arg1[%c0] : memref<2xf32, #tpu.memory_space<smem>>
    %c0_0 = arith.constant 0 : index
    %c0_1 = arith.constant 0 : index
    %1 = vector.load %arg2[%c0_0, %c0_1] : memref<128x128xf32, #tpu.memory_space<vmem>>, vector<128x128xf32>
    %2 = vector.broadcast %0 : f32 to vector<128x128xf32>
    %3 = arith.mulf %2, %1 : vector<128x128xf32>
    %c1 = arith.constant 1 : index
    %4 = memref.load %arg1[%c1] : memref<2xf32, #tpu.memory_space<smem>>
    %c0_2 = arith.constant 0 : index
    %c0_3 = arith.constant 0 : index
    %5 = vector.load %arg3[%c0_2, %c0_3] : memref<128x128xf32, #tpu.memory_space<vmem>>, vector<128x128xf32>
    %6 = vector.broadcast %4 : f32 to vector<128x128xf32>
    %7 = arith.mulf %6, %5 : vector<128x128xf32>
    %8 = arith.addf %3, %7 : vector<128x128xf32>
    %c0_4 = arith.constant 0 : index
    %c0_5 = arith.constant 0 : index
    %9 = vector.load %arg4[%c0_4, %c0_5] : memref<128x128xf32, #tpu.memory_space<vmem>>, vector<128x128xf32>
    tpu.vector_store %arg4[%c0_4, %c0_5], %8 {strides = array<i32>} : memref<128x128xf32, #tpu.memory_space<vmem>>, vector<128x128xf32>,
    return
  }
  func.func @transform_0(%arg0: i32, %arg1: memref<2xf32, #tpu.memory_space<smem>>) -> (i32, i32) {
    %c0_i32 = arith.constant 0 : i32
    %c0_i32_0 = arith.constant 0 : i32
    return %arg0, %c0_i32 : i32, i32
  }
  func.func @transform_1(%arg0: i32, %arg1: memref<2xf32, #tpu.memory_space<smem>>) -> (i32, i32) {
    %c0_i32 = arith.constant 0 : i32
    %c0_i32_0 = arith.constant 0 : i32
    return %arg0, %c0_i32 : i32, i32
  }
  func.func @transform_2(%arg0: i32, %arg1: memref<2xf32, #tpu.memory_space<smem>>) -> (i32, i32) {
    %c0_i32 = arith.constant 0 : i32
    %c0_i32_0 = arith.constant 0 : i32
    return %arg0, %c0_i32 : i32, i32
  }
}

</mosaic_0001>

<llo_original>
// kernel: tpu_custom_call.1
$region0: #{tpu_custom_call.1}
  #allocation0 [shape = 'u32[]', space=smem, size = 0x4, offset = 0x4, fixed_abs, tag = 'smem constant byte address 0x4 - core index']
  #allocation1 [shape = 'u32[144,128]{1,0:T(1,128)}', space=vmem, size = 0x12000, scoped, tag = 'internal scratch']
  #allocation2 [shape = 's32[1]{0}', space=sflag, size = 0x4, scoped, tag = 'scoped memory for tpu_custom_call.1']
  #allocation3 [shape = 'u8[512]{0}', space=smem, size = 0x200, scoped, tag = 'prefetched SMEM operand 0']
  %s0 = inlined_call_operand.hbm [shape: f32[2], index: 0, kind: input, shape index: {}]
  %s1 = inlined_call_operand.hbm [shape: f32[128,128], index: 1, kind: input, shape index: {}]
  %s2 = inlined_call_operand.hbm [shape: f32[128,128], index: 2, kind: input, shape index: {}]
  %s3 = inlined_call_operand.hbm [shape: f32[128,128], index: 3, kind: output, shape index: {}]
  %s4 = sld [smem:[#allocation0]]
  $region26: #{tpu_custom_call.1} parent=0
    _
  %s6 = ssub.s32 1, %s4
  %s7 = scalar_select 0, %s6, %s4
  %9 = dma.hbm_to_smem %s0, 16, [#allocation3], [#allocation2]
  %10 = dma.done [#allocation2], 16
  %11 = sfence
  $region1: #{tpu_custom_call.1} parent=0
    #allocation4 [shape = 'u8[65536]{0}', space=vmem, size = 0x10000, scoped, tag = 'input window, operand 1, single buffered']
    #allocation5 [shape = 's32[1]{0}', space=sflag, size = 0x4, scoped, tag = 'scoped memory for tpu_custom_call.1']
    #allocation6 [shape = 's32[1]{0}', space=sflag, size = 0x4, scoped, tag = 'scoped memory for tpu_custom_call.1']
    #allocation7 [shape = 'u8[65536]{0}', space=vmem, size = 0x10000, scoped, tag = 'input window, operand 2, single buffered']
    #allocation8 [shape = 's32[1]{0}', space=sflag, size = 0x4, scoped, tag = 'scoped memory for tpu_custom_call.1']
    #allocation9 [shape = 'u8[65536]{0}', space=vmem, size = 0x10000, scoped, tag = 'output window, operand 0, single buffered']
    %12 = vsyncpa [#allocation5], 0
    %13 = vsyncpa [#allocation8], 0
    %14 = vsyncpa [#allocation6], 0
    // Predicated region
    $region2: #{tpu_custom_call.1} parent=1 // pred_check
      _
    $region3: #{tpu_custom_call.1} parent=1 // pred_check_branch
      %16 = sbr.rel (0) target = $region5
    $region4: #{tpu_custom_call.1} parent=1 // pred_region
      %s18 = ssub.s32 2048, 2048
      %19 = vsyncadd [#allocation5], %s18
      %s20 = sshll.u32 [#allocation4], 4
      %s21 = int_to_ptr.vmem [resolvable:$true] %s20
      %26 = dma.hbm_to_vmem [thread:$0]  %s1, 2048, %s21, [#allocation5], 128, 128, 8
    $region5: #{tpu_custom_call.1} parent=1 // pred_fallthru
      _
    // Predicated region
    $region6: #{tpu_custom_call.1} parent=1 // pred_check
      _
    $region7: #{tpu_custom_call.1} parent=1 // pred_check_branch
      %28 = sbr.rel (0) target = $region9
    $region8: #{tpu_custom_call.1} parent=1 // pred_region
      %s30 = ssub.s32 2048, 2048
      %31 = vsyncadd [#allocation8], %s30
      %s32 = sshll.u32 [#allocation7], 4
      %s33 = int_to_ptr.vmem [resolvable:$true] %s32
      %38 = dma.hbm_to_vmem [thread:$0]  %s2, 2048, %s33, [#allocation8], 128, 128, 8
    $region9: #{tpu_custom_call.1} parent=1 // pred_fallthru
      _
    // Predicated region
    $region10: #{tpu_custom_call.1} parent=1 // pred_check
      _
    $region11: #{tpu_custom_call.1} parent=1 // pred_check_branch
      %40 = sbr.rel (0) target = $region13
    $region12: #{tpu_custom_call.1} parent=1 // pred_region
      %41 = dma.done [#allocation5], 2048
    $region13: #{tpu_custom_call.1} parent=1 // pred_fallthru
      _
    // Predicated region
    $region14: #{tpu_custom_call.1} parent=1 // pred_check
      _
    $region15: #{tpu_custom_call.1} parent=1 // pred_check_branch
      %43 = sbr.rel (0) target = $region17
    $region16: #{tpu_custom_call.1} parent=1 // pred_region
      %44 = dma.done [#allocation8], 2048
    $region17: #{tpu_custom_call.1} parent=1 // pred_fallthru
      _
    %s45 = sld [smem:[#allocation3]]
    %v46 = vld [vmem:[#allocation4] sm:$0xff]
    %v47 = vld [vmem:[#allocation4 + $0x8] sm:$0xff]
    %v48 = vld [vmem:[#allocation4 + $0x10] sm:$0xff]
    %v49 = vld [vmem:[#allocation4 + $0x18] sm:$0xff]
    %v50 = vld [vmem:[#allocation4 + $0x20] sm:$0xff]
    %v51 = vld [vmem:[#allocation4 + $0x28] sm:$0xff]
    %v52 = vld [vmem:[#allocation4 + $0x30] sm:$0xff]
    %v53 = vld [vmem:[#allocation4 + $0x38] sm:$0xff]
    %v54 = vld [vmem:[#allocation4 + $0x40] sm:$0xff]
    %v55 = vld [vmem:[#allocation4 + $0x48] sm:$0xff]
    %v56 = vld [vmem:[#allocation4 + $0x50] sm:$0xff]
    %v57 = vld [vmem:[#allocation4 + $0x58] sm:$0xff]
    %v58 = vld [vmem:[#allocation4 + $0x60] sm:$0xff]
    %v59 = vld [vmem:[#allocation4 + $0x68] sm:$0xff]
    %v60 = vld [vmem:[#allocation4 + $0x70] sm:$0xff]
    %v61 = vld [vmem:[#allocation4 + $0x78] sm:$0xff]
    %v62 = vstv %s45
    %v63 = vmul.f32 %v62, %v46
    %v64 = vmul.f32 %v62, %v47
    %v65 = vmul.f32 %v62, %v48
    %v66 = vmul.f32 %v62, %v49
    %v67 = vmul.f32 %v62, %v50
    %v68 = vmul.f32 %v62, %v51
    %v69 = vmul.f32 %v62, %v52
    %v70 = vmul.f32 %v62, %v53
    %v71 = vmul.f32 %v62, %v54
    %v72 = vmul.f32 %v62, %v55
    %v73 = vmul.f32 %v62, %v56
    %v74 = vmul.f32 %v62, %v57
    %v75 = vmul.f32 %v62, %v58
    %v76 = vmul.f32 %v62, %v59
    %v77 = vmul.f32 %v62, %v60
    %v78 = vmul.f32 %v62, %v61
    %s79 = sld [smem:[#allocation3 + $0x1]]
    %v80 = vld [vmem:[#allocation7] sm:$0xff]
    %v81 = vld [vmem:[#allocation7 + $0x8] sm:$0xff]
    %v82 = vld [vmem:[#allocation7 + $0x10] sm:$0xff]
    %v83 = vld [vmem:[#allocation7 + $0x18] sm:$0xff]
    %v84 = vld [vmem:[#allocation7 + $0x20] sm:$0xff]
    %v85 = vld [vmem:[#allocation7 + $0x28] sm:$0xff]
    %v86 = vld [vmem:[#allocation7 + $0x30] sm:$0xff]
    %v87 = vld [vmem:[#allocation7 + $0x38] sm:$0xff]
    %v88 = vld [vmem:[#allocation7 + $0x40] sm:$0xff]
    %v89 = vld [vmem:[#allocation7 + $0x48] sm:$0xff]
    %v90 = vld [vmem:[#allocation7 + $0x50] sm:$0xff]
    %v91 = vld [vmem:[#allocation7 + $0x58] sm:$0xff]
    %v92 = vld [vmem:[#allocation7 + $0x60] sm:$0xff]
    %v93 = vld [vmem:[#allocation7 + $0x68] sm:$0xff]
    %v94 = vld [vmem:[#allocation7 + $0x70] sm:$0xff]
    %v95 = vld [vmem:[#allocation7 + $0x78] sm:$0xff]
    %v96 = vstv %s79
    %v97 = vmul.f32 %v96, %v80
    %v98 = vmul.f32 %v96, %v81
    %v99 = vmul.f32 %v96, %v82
    %v100 = vmul.f32 %v96, %v83
    %v101 = vmul.f32 %v96, %v84
    %v102 = vmul.f32 %v96, %v85
    %v103 = vmul.f32 %v96, %v86
    %v104 = vmul.f32 %v96, %v87
    %v105 = vmul.f32 %v96, %v88
    %v106 = vmul.f32 %v96, %v89
    %v107 = vmul.f32 %v96, %v90
    %v108 = vmul.f32 %v96, %v91
    %v109 = vmul.f32 %v96, %v92
    %v110 = vmul.f32 %v96, %v93
    %v111 = vmul.f32 %v96, %v94
    %v112 = vmul.f32 %v96, %v95
    %v113 = vadd.f32 %v63, %v97
    %v114 = vadd.f32 %v64, %v98
    %v115 = vadd.f32 %v65, %v99
    %v116 = vadd.f32 %v66, %v100
    %v117 = vadd.f32 %v67, %v101
    %v118 = vadd.f32 %v68, %v102
    %v119 = vadd.f32 %v69, %v103
    %v120 = vadd.f32 %v70, %v104
    %v121 = vadd.f32 %v71, %v105
    %v122 = vadd.f32 %v72, %v106
    %v123 = vadd.f32 %v73, %v107
    %v124 = vadd.f32 %v74, %v108
    %v125 = vadd.f32 %v75, %v109
    %v126 = vadd.f32 %v76, %v110
    %v127 = vadd.f32 %v77, %v111
    %v128 = vadd.f32 %v78, %v112
    %129 = vst [vmem:[#allocation9] sm:$0xff] %v113
    %130 = vst [vmem:[#allocation9 + $0x8] sm:$0xff] %v114
    %131 = vst [vmem:[#allocation9 + $0x10] sm:$0xff] %v115
    %132 = vst [vmem:[#allocation9 + $0x18] sm:$0xff] %v116
    %133 = vst [vmem:[#allocation9 + $0x20] sm:$0xff] %v117
    %134 = vst [vmem:[#allocation9 + $0x28] sm:$0xff] %v118
    %135 = vst [vmem:[#allocation9 + $0x30] sm:$0xff] %v119
    %136 = vst [vmem:[#allocation9 + $0x38] sm:$0xff] %v120
    %137 = vst [vmem:[#allocation9 + $0x40] sm:$0xff] %v121
    %138 = vst [vmem:[#allocation9 + $0x48] sm:$0xff] %v122
    %139 = vst [vmem:[#allocation9 + $0x50] sm:$0xff] %v123
    %140 = vst [vmem:[#allocation9 + $0x58] sm:$0xff] %v124
    %141 = vst [vmem:[#allocation9 + $0x60] sm:$0xff] %v125
    %142 = vst [vmem:[#allocation9 + $0x68] sm:$0xff] %v126
    %143 = vst [vmem:[#allocation9 + $0x70] sm:$0xff] %v127
    %144 = vst [vmem:[#allocation9 + $0x78] sm:$0xff] %v128
    // Predicated region
    $region18: #{tpu_custom_call.1} parent=1 // pred_check
      _
    $region19: #{tpu_custom_call.1} parent=1 // pred_check_branch
      %146 = sbr.rel (0) target = $region21
    $region20: #{tpu_custom_call.1} parent=1 // pred_region
      %s148 = ssub.s32 2048, 2048
      %149 = vsyncadd [#allocation6], %s148
      %s150 = sshll.u32 [#allocation9], 4
      %s151 = int_to_ptr.vmem [resolvable:$true] %s150
      %156 = dma.vmem_to_hbm [thread:$0]  %s151, 2048, %s3, [#allocation6], 128, 128, 8
    $region21: #{tpu_custom_call.1} parent=1 // pred_fallthru
      _
    // Predicated region
    $region22: #{tpu_custom_call.1} parent=1 // pred_check
      _
    $region23: #{tpu_custom_call.1} parent=1 // pred_check_branch
      %158 = sbr.rel (0) target = $region25
    $region24: #{tpu_custom_call.1} parent=1 // pred_region
      %159 = dma.done [#allocation6], 2048
    $region25: #{tpu_custom_call.1} parent=1 // pred_fallthru
      _
    %160 = vsyncpa [#allocation5], 1
    %161 = vsyncpa [#allocation8], 1
    %162 = vsyncpa [#allocation6], 1

</llo_original>
